<compile_context>
chip_gen: v7x
topology: tpu7x:2x2x1
jax: 0.10.0
libtpu: 0.0.40
codegen_flags: <defaults>
</compile_context>

<pallas_src>
import jax
import jax.numpy as jnp
from jax.experimental import pallas as pl
from jax.experimental.pallas import tpu as pltpu

WORLD_SIZE = 4


def _all_gather_dma_kernel(x_hbm_ref, o_hbm_ref, copy_sem):
    # x_hbm_ref: (world, N, D) raw HBM ref (no auto-DMA / no VMEM staging)
    # o_hbm_ref: (world, N, D) raw HBM ref (reshaped to (world*N, D) by caller)
    # copy_sem:  single DMA semaphore
    # One maximal-extent contiguous HBM->HBM DMA covers every output byte.
    cp = pltpu.make_async_copy(x_hbm_ref, o_hbm_ref, copy_sem)
    cp.start()
    cp.wait()


def all_gather_dim0(x_shards, *, use_pallas_copy=True):
    """Simulated funcol.all_gather_tensor(x, 0, [0, 1, 2, 3]).

    x_shards: (world, N, D) — per-rank tensors stacked along a leading axis.
    returns:  (world*N, D)  — concatenation along dim 0 (same result on every rank).

    use_pallas_copy=False takes the single-device fast path (pure reshape, zero
    data movement).  The Pallas path is the runnable template for the real
    multi-chip collective.
    """
    world, n, d = x_shards.shape
    assert world == WORLD_SIZE

    if not use_pallas_copy:
        # Single-device fast path: the gather is metadata-only (free reshape).
        return x_shards.reshape(world * n, d)

    itemsize = jnp.dtype(x_shards.dtype).itemsize
    total_bytes = world * n * d * itemsize

    gathered = pl.pallas_call(
        _all_gather_dma_kernel,
        # Same (world, N, D) layout as the input -> one contiguous DMA; the
        # (world*N, D) result is a free bitcast-reshape below.
        out_shape=jax.ShapeDtypeStruct((world, n, d), x_shards.dtype),
        # Raw HBM refs on both sides -> direct HBM->HBM DMA, no VMEM/vreg hop.
        in_specs=[pl.BlockSpec(memory_space=pl.ANY)],
        out_specs=pl.BlockSpec(memory_space=pl.ANY),
        scratch_shapes=[pltpu.SemaphoreType.DMA(())],
        cost_estimate=pl.CostEstimate(
            flops=0, transcendentals=0, bytes_accessed=2 * total_bytes),
    )(x_shards)
    return gathered.reshape(world * n, d)


if __name__ == "__main__":
    key = jax.random.PRNGKey(0)
    N, D = 8, 128  # per-rank local tensor shape; D multiple of 128 (lane-dense)
    # 4 distinct per-rank inputs (what each rank would contribute)
    x_shards = jax.random.normal(key, (WORLD_SIZE, N, D), dtype=jnp.float32)

    # Exercise the Pallas DMA kernel (the multi-chip template).
    out = all_gather_dim0(x_shards, use_pallas_copy=True)
    out = jax.block_until_ready(out)

    # reference: all_gather along dim 0 == concatenate the per-rank tensors
    ref = jnp.concatenate([x_shards[r] for r in range(WORLD_SIZE)], axis=0)
    assert out.shape == (WORLD_SIZE * N, D), out.shape
    assert jnp.array_equal(out, ref), "all-gather (kernel) result mismatch"

    # Single-device fast path must agree bit-exactly.
    fast = jax.block_until_ready(all_gather_dim0(x_shards, use_pallas_copy=False))
    assert jnp.array_equal(fast, ref), "all-gather (fast path) result mismatch"

    print("KERNEL_OK")
</pallas_src>

<mosaic_0001>
module attributes {stable_mosaic.version = 11 : i64} {
  func.func @_all_gather_dma_kernel(%arg0: memref<4x8x128xf32, #tpu.memory_space<any>>, %arg1: memref<4x8x128xf32, #tpu.memory_space<any>>, %arg2: memref<!tpu.dma_semaphore, #tpu.memory_space<semaphore_mem>>) attributes {dimension_semantics = [], scalar_prefetch = 0 : i64, scratch_operands = 1 : i64, tpu.core_type = #tpu.core_type<tc>} {
    tpu.enqueue_dma source(%arg0 : memref<4x8x128xf32, #tpu.memory_space<any>>) target(%arg1 : memref<4x8x128xf32, #tpu.memory_space<any>>) target_semaphore(%arg2 : memref<!tpu.dma_semaphore, #tpu.memory_space<semaphore_mem>>)
    tpu.wait_dma2 semaphore(%arg2 : memref<!tpu.dma_semaphore, #tpu.memory_space<semaphore_mem>>) src(%arg0 : memref<4x8x128xf32, #tpu.memory_space<any>>) dst(%arg1 : memref<4x8x128xf32, #tpu.memory_space<any>>)
    return
  }
}

</mosaic_0001>

<llo_original>
// kernel: tpu_custom_call.1
$region0: #{tpu_custom_call.1}
  #allocation0 [shape = 'u32[]', space=smem, size = 0x4, offset = 0x4, fixed_abs, tag = 'smem constant byte address 0x4 - core index']
  #allocation1 [shape = 'u32[144,128]{1,0:T(1,128)}', space=vmem, size = 0x12000, scoped, tag = 'internal scratch']
  #allocation2 [shape = 's32[1]{0}', space=sflag, size = 0x4, scoped, tag = 'scratch operand']
  #allocation3 [shape = 's32[]', space=sflag, size = 0x4, offset = 0, fixed_abs, tag = 'sflag constant byte address 0x0 - dummy sync flag']
  #allocation4 [shape = 'u32[0]{0}', space=smem, size = 0, offset = 0, fixed_abs, tag = 'smem constant byte address 0x0 - null']
  %s0 = inlined_call_operand.hbm [shape: f32[4,8,128], index: 0, kind: input, shape index: {}]
  %s1 = inlined_call_operand.hbm [shape: f32[4,8,128], index: 1, kind: output, shape index: {}]
  %s2 = sld [smem:[#allocation0]]
  $region2: #{tpu_custom_call.1} parent=0
    _
  %s4 = ssub.s32 1, %s2
  %s5 = scalar_select 0, %s4, %s2
  %s7 = sshll.u32 1, 14
  %s8 = sxor.u32 4294967295, %s7
  %s11 = sshll.u32 3, 24
  %s12 = sxor.u32 4294967295, %s11
  %s13 = sand.u32 0, %s12
  %s15 = sor.u32 %s13, 0
  %18 = dma.general %s0, 512, %s1, [#allocation2], [#allocation3], [#allocation4], %s15, 0
  %s19 = smul.u32 4, 8
  %s20 = smul.u32 %s19, 1
  %s21 = sshll.u32 %s20, 4
  %22 = dma.done [#allocation2], %s21
  %23 = vsyncmov [#allocation2]
  %s24 = vpop.sfrf %23
  %p25 = scmp.eq.s32.totalorder %s24, 0
  %p26 = pneg %p25
  %28 = shalt.err (%p26)

</llo_original>
